<compile_context>
chip_gen: v5e
topology: v5e:2x2
jax: 0.10.0
libtpu: 0.0.40
codegen_flags: <defaults>
</compile_context>

<pallas_src>
import functools
import math

import jax
import jax.numpy as jnp
from jax.experimental import pallas as pl
from jax.experimental.pallas import tpu as pltpu

LANES = 128
MAX_BLOCK_ROWS = 2048  # (2048, 128) f32 = 1 MiB per input block


def _iou_kernel(pr_ref, gt_ref, out_ref, acc_i_ref, acc_p_ref, acc_g_ref, *,
                logit_thr, eps, valid_rows, block_rows):
    i = pl.program_id(0)

    @pl.when(i == 0)
    def _init():
        acc_i_ref[...] = jnp.zeros_like(acc_i_ref)
        acc_p_ref[...] = jnp.zeros_like(acc_p_ref)
        acc_g_ref[...] = jnp.zeros_like(acc_g_ref)

    # Mask rows that fall outside the real array (ragged last grid block).
    row_ids = i * block_rows + jax.lax.broadcasted_iota(
        jnp.int32, (block_rows, LANES), 0)
    valid = row_ids < valid_rows

    pr = pr_ref[...].astype(jnp.float32)
    gt = gt_ref[...].astype(jnp.float32)

    # sigmoid(pr) > threshold  <=>  pr > logit(threshold)  (pure VPU compare).
    pr_bin = jnp.where(jnp.logical_and(valid, pr > logit_thr), 1.0, 0.0)
    gt_val = jnp.where(valid, gt, 0.0)

    # Per-step reductions only collapse the row axis (mostly vreg-wise VPU
    # adds); the cross-lane reduce is deferred to the finalize step.
    acc_i_ref[...] += jnp.sum(gt_val * pr_bin, axis=0, keepdims=True)
    acc_p_ref[...] += jnp.sum(pr_bin, axis=0, keepdims=True)
    acc_g_ref[...] += jnp.sum(gt_val, axis=0, keepdims=True)

    @pl.when(i == pl.num_programs(0) - 1)
    def _finalize():
        inter = jnp.sum(acc_i_ref[...], axis=1, keepdims=True)   # (1, 1)
        s_pr = jnp.sum(acc_p_ref[...], axis=1, keepdims=True)
        s_gt = jnp.sum(acc_g_ref[...], axis=1, keepdims=True)
        out_ref[...] = inter / (s_gt + s_pr - inter + eps)


def iou_metric(y_pr, y_gt, eps=1e-7, threshold=0.5):
    """IoU / Jaccard score: thresholded sigmoid(y_pr) vs binary y_gt."""
    assert y_pr.shape == y_gt.shape
    total = int(y_pr.size)
    logit_thr = float(math.log(threshold / (1.0 - threshold)))

    # Flatten (metadata-only reshape for contiguous inputs; no dtype casts).
    pr_flat = jnp.reshape(y_pr, (-1,))
    gt_flat = jnp.reshape(y_gt, (-1,))

    # Only pad up to the 128-lane boundary (rarely needed; tiny if it is).
    pad = (-total) % LANES
    if pad:
        # -1e30 fails any finite logit threshold -> contributes 0 everywhere.
        pr_flat = jnp.pad(pr_flat, (0, pad), constant_values=-1e30)
        gt_flat = jnp.pad(gt_flat, (0, pad), constant_values=0)

    rows = (total + pad) // LANES
    block_rows = min(MAX_BLOCK_ROWS, ((rows + 7) // 8) * 8)
    grid = (-(-rows // block_rows),)

    pr2d = pr_flat.reshape(rows, LANES)
    gt2d = gt_flat.reshape(rows, LANES)

    kernel = functools.partial(
        _iou_kernel,
        logit_thr=logit_thr,
        eps=float(eps),
        valid_rows=rows,
        block_rows=block_rows,
    )

    out = pl.pallas_call(
        kernel,
        out_shape=jax.ShapeDtypeStruct((1, 1), jnp.float32),
        grid_spec=pltpu.PrefetchScalarGridSpec(
            num_scalar_prefetch=0,
            grid=grid,
            in_specs=[
                pl.BlockSpec((block_rows, LANES), lambda i: (i, 0)),
                pl.BlockSpec((block_rows, LANES), lambda i: (i, 0)),
            ],
            out_specs=pl.BlockSpec((1, 1), lambda i: (0, 0)),
            scratch_shapes=[
                pltpu.VMEM((1, LANES), jnp.float32),  # intersection partials
                pltpu.VMEM((1, LANES), jnp.float32),  # sum(pr) partials
                pltpu.VMEM((1, LANES), jnp.float32),  # sum(gt) partials
            ],
        ),
        compiler_params=pltpu.CompilerParams(
            dimension_semantics=("arbitrary",),  # running reduction over grid
        ),
    )(pr2d, gt2d)

    return out[0, 0]


def iou_reference(y_pr, y_gt, eps=1e-7, threshold=0.5):
    pr = jax.nn.sigmoid(y_pr.astype(jnp.float32))
    pr = (pr > threshold).astype(jnp.float32)
    gt = y_gt.astype(jnp.float32)
    inter = jnp.sum(gt * pr)
    union = jnp.sum(gt) + jnp.sum(pr) - inter + eps
    return inter / union


if __name__ == "__main__":
    key = jax.random.PRNGKey(0)
    k1, k2 = jax.random.split(key)

    # NCHW prediction logits and binary ground truth.
    B, C, H, W = 2, 4, 16, 16
    y_pr = jax.random.normal(k1, (B, C, H, W), dtype=jnp.float32)   # logits
    y_gt = (jax.random.uniform(k2, (B, C, H, W)) > 0.5).astype(jnp.float32)

    result = iou_metric(y_pr, y_gt)
    jax.block_until_ready(result)

    ref = iou_reference(y_pr, y_gt)
    assert jnp.allclose(result, ref, atol=1e-5, rtol=1e-5), (result, ref)

    print("KERNEL_OK")
</pallas_src>

<mosaic_0001>
module attributes {stable_mosaic.version = 11 : i64} {
  func.func @_iou_kernel(%arg0: i32, %arg1: memref<16x128xf32, #tpu.memory_space<vmem>>, %arg2: memref<16x128xf32, #tpu.memory_space<vmem>>, %arg3: memref<1x1xf32, #tpu.memory_space<vmem>>, %arg4: memref<1x128xf32, #tpu.memory_space<vmem>>, %arg5: memref<1x128xf32, #tpu.memory_space<vmem>>, %arg6: memref<1x128xf32, #tpu.memory_space<vmem>>) attributes {dimension_semantics = [#tpu.dimension_semantics<arbitrary>], iteration_bounds = array<i64: 1>, scalar_prefetch = 0 : i64, scratch_operands = 3 : i64, tpu.core_type = #tpu.core_type<tc>, window_params = [{transform_indices = @transform_0, window_bounds = array<i64: 16, 128>}, {transform_indices = @transform_1, window_bounds = array<i64: 16, 128>}, {pipeline_mode = #tpu.pipeline_mode<synchronous>, transform_indices = @transform_2, window_bounds = array<i64: 1, 1>}]} {
    %c0_i32 = arith.constant 0 : i32
    %0 = arith.cmpi eq, %arg0, %c0_i32 : i32
    %1 = arith.extui %0 : i1 to i32
    %c0_i32_0 = arith.constant 0 : i32
    %2 = arith.cmpi ne, %1, %c0_i32_0 : i32
    scf.if %2 {
      %cst_25 = arith.constant 0.000000e+00 : f32
      %38 = vector.broadcast %cst_25 : f32 to vector<1x128xf32>
      %c0_26 = arith.constant 0 : index
      %c0_27 = arith.constant 0 : index
      %39 = vector.load %arg4[%c0_26, %c0_27] : memref<1x128xf32, #tpu.memory_space<vmem>>, vector<1x128xf32>
      tpu.vector_store %arg4[%c0_26, %c0_27], %38 {strides = array<i32>} : memref<1x128xf32, #tpu.memory_space<vmem>>, vector<1x128xf32>,
      %cst_28 = arith.constant 0.000000e+00 : f32
      %40 = vector.broadcast %cst_28 : f32 to vector<1x128xf32>
      %c0_29 = arith.constant 0 : index
      %c0_30 = arith.constant 0 : index
      %41 = vector.load %arg5[%c0_29, %c0_30] : memref<1x128xf32, #tpu.memory_space<vmem>>, vector<1x128xf32>
      tpu.vector_store %arg5[%c0_29, %c0_30], %40 {strides = array<i32>} : memref<1x128xf32, #tpu.memory_space<vmem>>, vector<1x128xf32>,
      %cst_31 = arith.constant 0.000000e+00 : f32
      %42 = vector.broadcast %cst_31 : f32 to vector<1x128xf32>
      %c0_32 = arith.constant 0 : index
      %c0_33 = arith.constant 0 : index
      %43 = vector.load %arg6[%c0_32, %c0_33] : memref<1x128xf32, #tpu.memory_space<vmem>>, vector<1x128xf32>
      tpu.vector_store %arg6[%c0_32, %c0_33], %42 {strides = array<i32>} : memref<1x128xf32, #tpu.memory_space<vmem>>, vector<1x128xf32>,
    } else {
    }
    %c16_i32 = arith.constant 16 : i32
    %3 = arith.muli %arg0, %c16_i32 : i32
    %4 = tpu.iota {dimensions = array<i32: 0>} : vector<16x128xi32>
    %5 = vector.broadcast %3 : i32 to vector<16x128xi32>
    %6 = arith.addi %5, %4 : vector<16x128xi32>
    %c16_i32_1 = arith.constant 16 : i32
    %7 = vector.broadcast %c16_i32_1 : i32 to vector<16x128xi32>
    %8 = arith.cmpi slt, %6, %7 : vector<16x128xi32>
    %c0 = arith.constant 0 : index
    %c0_2 = arith.constant 0 : index
    %9 = vector.load %arg1[%c0, %c0_2] : memref<16x128xf32, #tpu.memory_space<vmem>>, vector<16x128xf32>
    %c0_3 = arith.constant 0 : index
    %c0_4 = arith.constant 0 : index
    %10 = vector.load %arg2[%c0_3, %c0_4] : memref<16x128xf32, #tpu.memory_space<vmem>>, vector<16x128xf32>
    %cst = arith.constant 0.000000e+00 : f32
    %11 = vector.broadcast %cst : f32 to vector<16x128xf32>
    %12 = arith.cmpf ogt, %9, %11 : vector<16x128xf32>
    %13 = arith.andi %8, %12 : vector<16x128xi1>
    %cst_5 = arith.constant 1.000000e+00 : f32
    %cst_6 = arith.constant 0.000000e+00 : f32
    %14 = vector.broadcast %cst_5 : f32 to vector<16x128xf32>
    %15 = vector.broadcast %cst_6 : f32 to vector<16x128xf32>
    %16 = arith.select %13, %14, %15 : vector<16x128xi1>, vector<16x128xf32>
    %cst_7 = arith.constant 0.000000e+00 : f32
    %17 = vector.broadcast %cst_7 : f32 to vector<16x128xf32>
    %18 = arith.select %8, %10, %17 : vector<16x128xi1>, vector<16x128xf32>
    %c0_8 = arith.constant 0 : index
    %c0_9 = arith.constant 0 : index
    %19 = vector.load %arg4[%c0_8, %c0_9] : memref<1x128xf32, #tpu.memory_space<vmem>>, vector<1x128xf32>
    %20 = arith.mulf %18, %16 : vector<16x128xf32>
    %cst_10 = arith.constant dense<0.000000e+00> : vector<128xf32>
    %21 = vector.multi_reduction <add>, %20, %cst_10 [0] : vector<16x128xf32> to vector<128xf32>
    %22 = vector.shape_cast %21 : vector<128xf32> to vector<1x128xf32>
    %23 = arith.addf %19, %22 : vector<1x128xf32>
    %c0_11 = arith.constant 0 : index
    %c0_12 = arith.constant 0 : index
    %24 = vector.load %arg4[%c0_11, %c0_12] : memref<1x128xf32, #tpu.memory_space<vmem>>, vector<1x128xf32>
    tpu.vector_store %arg4[%c0_11, %c0_12], %23 {strides = array<i32>} : memref<1x128xf32, #tpu.memory_space<vmem>>, vector<1x128xf32>,
    %c0_13 = arith.constant 0 : index
    %c0_14 = arith.constant 0 : index
    %25 = vector.load %arg5[%c0_13, %c0_14] : memref<1x128xf32, #tpu.memory_space<vmem>>, vector<1x128xf32>
    %cst_15 = arith.constant dense<0.000000e+00> : vector<128xf32>
    %26 = vector.multi_reduction <add>, %16, %cst_15 [0] : vector<16x128xf32> to vector<128xf32>
    %27 = vector.shape_cast %26 : vector<128xf32> to vector<1x128xf32>
    %28 = arith.addf %25, %27 : vector<1x128xf32>
    %c0_16 = arith.constant 0 : index
    %c0_17 = arith.constant 0 : index
    %29 = vector.load %arg5[%c0_16, %c0_17] : memref<1x128xf32, #tpu.memory_space<vmem>>, vector<1x128xf32>
    tpu.vector_store %arg5[%c0_16, %c0_17], %28 {strides = array<i32>} : memref<1x128xf32, #tpu.memory_space<vmem>>, vector<1x128xf32>,
    %c0_18 = arith.constant 0 : index
    %c0_19 = arith.constant 0 : index
    %30 = vector.load %arg6[%c0_18, %c0_19] : memref<1x128xf32, #tpu.memory_space<vmem>>, vector<1x128xf32>
    %cst_20 = arith.constant dense<0.000000e+00> : vector<128xf32>
    %31 = vector.multi_reduction <add>, %18, %cst_20 [0] : vector<16x128xf32> to vector<128xf32>
    %32 = vector.shape_cast %31 : vector<128xf32> to vector<1x128xf32>
    %33 = arith.addf %30, %32 : vector<1x128xf32>
    %c0_21 = arith.constant 0 : index
    %c0_22 = arith.constant 0 : index
    %34 = vector.load %arg6[%c0_21, %c0_22] : memref<1x128xf32, #tpu.memory_space<vmem>>, vector<1x128xf32>
    tpu.vector_store %arg6[%c0_21, %c0_22], %33 {strides = array<i32>} : memref<1x128xf32, #tpu.memory_space<vmem>>, vector<1x128xf32>,
    %c0_i32_23 = arith.constant 0 : i32
    %35 = arith.cmpi eq, %arg0, %c0_i32_23 : i32
    %36 = arith.extui %35 : i1 to i32
    %c0_i32_24 = arith.constant 0 : i32
    %37 = arith.cmpi ne, %36, %c0_i32_24 : i32
    scf.if %37 {
      %c0_25 = arith.constant 0 : index
      %c0_26 = arith.constant 0 : index
      %38 = vector.load %arg4[%c0_25, %c0_26] : memref<1x128xf32, #tpu.memory_space<vmem>>, vector<1x128xf32>
      %cst_27 = arith.constant dense<0.000000e+00> : vector<1xf32>
      %39 = vector.multi_reduction <add>, %38, %cst_27 [1] : vector<1x128xf32> to vector<1xf32>
      %40 = vector.shape_cast %39 : vector<1xf32> to vector<1x1xf32>
      %c0_28 = arith.constant 0 : index
      %c0_29 = arith.constant 0 : index
      %41 = vector.load %arg5[%c0_28, %c0_29] : memref<1x128xf32, #tpu.memory_space<vmem>>, vector<1x128xf32>
      %cst_30 = arith.constant dense<0.000000e+00> : vector<1xf32>
      %42 = vector.multi_reduction <add>, %41, %cst_30 [1] : vector<1x128xf32> to vector<1xf32>
      %43 = vector.shape_cast %42 : vector<1xf32> to vector<1x1xf32>
      %c0_31 = arith.constant 0 : index
      %c0_32 = arith.constant 0 : index
      %44 = vector.load %arg6[%c0_31, %c0_32] : memref<1x128xf32, #tpu.memory_space<vmem>>, vector<1x128xf32>
      %cst_33 = arith.constant dense<0.000000e+00> : vector<1xf32>
      %45 = vector.multi_reduction <add>, %44, %cst_33 [1] : vector<1x128xf32> to vector<1xf32>
      %46 = vector.shape_cast %45 : vector<1xf32> to vector<1x1xf32>
      %47 = arith.addf %46, %43 : vector<1x1xf32>
      %48 = arith.subf %47, %40 : vector<1x1xf32>
      %cst_34 = arith.constant 1.000000e-07 : f32
      %49 = vector.broadcast %cst_34 : f32 to vector<1x1xf32>
      %50 = arith.addf %48, %49 : vector<1x1xf32>
      %51 = arith.divf %40, %50 : vector<1x1xf32>
      %c0_35 = arith.constant 0 : index
      %c0_36 = arith.constant 0 : index
      %52 = vector.load %arg3[%c0_35, %c0_36] : memref<1x1xf32, #tpu.memory_space<vmem>>, vector<1x1xf32>
      tpu.vector_store %arg3[%c0_35, %c0_36], %51 {strides = array<i32>} : memref<1x1xf32, #tpu.memory_space<vmem>>, vector<1x1xf32>,
    } else {
    }
    return
  }
  func.func @transform_0(%arg0: i32) -> (i32, i32) {
    %c0_i32 = arith.constant 0 : i32
    %c0_i32_0 = arith.constant 0 : i32
    return %arg0, %c0_i32 : i32, i32
  }
  func.func @transform_1(%arg0: i32) -> (i32, i32) {
    %c0_i32 = arith.constant 0 : i32
    %c0_i32_0 = arith.constant 0 : i32
    return %arg0, %c0_i32 : i32, i32
  }
  func.func @transform_2(%arg0: i32) -> (i32, i32) {
    %c0_i32 = arith.constant 0 : i32
    %c0_i32_0 = arith.constant 0 : i32
    %c0_i32_1 = arith.constant 0 : i32
    return %c0_i32, %c0_i32_0 : i32, i32
  }
}

</mosaic_0001>

<llo_original>
// kernel: tpu_custom_call.1
$region0: #{tpu_custom_call.1}
  #allocation0 [shape = 'u32[]', space=smem, size = 0x4, offset = 0x4, fixed_abs, tag = 'smem constant byte address 0x4 - core index']
  #allocation1 [shape = 'u32[72,128]{1,0:T(1,128)}', space=vmem, size = 0x9000, scoped, tag = 'internal scratch']
  #allocation2 [shape = 'f32[1,128]{1,0:T(1,128)}', space=vmem, size = 0x200, scoped, tag = 'scratch operand']
  #allocation3 [shape = 'f32[1,128]{1,0:T(1,128)}', space=vmem, size = 0x200, scoped, tag = 'scratch operand']
  #allocation4 [shape = 'f32[1,128]{1,0:T(1,128)}', space=vmem, size = 0x200, scoped, tag = 'scratch operand']
  %s0 = inlined_call_operand.hbm [shape: f32[16,128], index: 0, kind: input, shape index: {}]
  %s1 = inlined_call_operand.hbm [shape: f32[16,128], index: 1, kind: input, shape index: {}]
  %s2 = inlined_call_operand.hbm [shape: f32[1,1], index: 2, kind: output, shape index: {}]
  %s3 = sld [smem:[#allocation0]]
  $region34: #{tpu_custom_call.1} parent=0
    _
  %s5 = ssub.s32 1, %s3
  %s6 = scalar_select 0, %s5, %s3
  $region1: #{tpu_custom_call.1} parent=0
    #allocation5 [shape = 'u8[8192]{0}', space=vmem, size = 0x2000, scoped, tag = 'input window, operand 0, single buffered']
    #allocation6 [shape = 's32[1]{0}', space=sflag, size = 0x4, scoped, tag = 'scoped memory for tpu_custom_call.1']
    #allocation7 [shape = 's32[1]{0}', space=sflag, size = 0x4, scoped, tag = 'scoped memory for tpu_custom_call.1']
    #allocation8 [shape = 'u8[8192]{0}', space=vmem, size = 0x2000, scoped, tag = 'input window, operand 1, single buffered']
    #allocation9 [shape = 's32[1]{0}', space=sflag, size = 0x4, scoped, tag = 'scoped memory for tpu_custom_call.1']
    #allocation10 [shape = 'u8[512]{0}', space=vmem, size = 0x400, scoped, tag = 'output window, operand 0, single buffered']
    %7 = vsyncpa [#allocation6], 0
    %8 = vsyncpa [#allocation9], 0
    %9 = vsyncpa [#allocation7], 0
    // Predicated region
    $region2: #{tpu_custom_call.1} parent=1 // pred_check
      _
    $region3: #{tpu_custom_call.1} parent=1 // pred_check_branch
      %11 = sbr.rel (0) target = $region5
    $region4: #{tpu_custom_call.1} parent=1 // pred_region
      %13 = vsyncadd [#allocation6], 0
      %s14 = sshll.u32 %s0, 4
      %s15 = int_to_ptr.hbm [resolvable:$true] %s14
      %s16 = sshll.u32 [#allocation5], 4
      %s17 = int_to_ptr.vmem [resolvable:$true] %s16
      %22 = dma.hbm_to_vmem [thread:$0]  %s15, 256, %s17, [#allocation6], 128, 128, 8
    $region5: #{tpu_custom_call.1} parent=1 // pred_fallthru
      _
    // Predicated region
    $region6: #{tpu_custom_call.1} parent=1 // pred_check
      _
    $region7: #{tpu_custom_call.1} parent=1 // pred_check_branch
      %24 = sbr.rel (0) target = $region9
    $region8: #{tpu_custom_call.1} parent=1 // pred_region
      %26 = vsyncadd [#allocation9], 0
      %s27 = sshll.u32 %s1, 4
      %s28 = int_to_ptr.hbm [resolvable:$true] %s27
      %s29 = sshll.u32 [#allocation8], 4
      %s30 = int_to_ptr.vmem [resolvable:$true] %s29
      %35 = dma.hbm_to_vmem [thread:$0]  %s28, 256, %s30, [#allocation9], 128, 128, 8
    $region9: #{tpu_custom_call.1} parent=1 // pred_fallthru
      _
    // Predicated region
    $region10: #{tpu_custom_call.1} parent=1 // pred_check
      _
    $region11: #{tpu_custom_call.1} parent=1 // pred_check_branch
      %37 = sbr.rel (0) target = $region13
    $region12: #{tpu_custom_call.1} parent=1 // pred_region
      %39 = dma.done [#allocation6], 256
    $region13: #{tpu_custom_call.1} parent=1 // pred_fallthru
      _
    // Predicated region
    $region14: #{tpu_custom_call.1} parent=1 // pred_check
      _
    $region15: #{tpu_custom_call.1} parent=1 // pred_check_branch
      %41 = sbr.rel (0) target = $region17
    $region16: #{tpu_custom_call.1} parent=1 // pred_region
      %43 = dma.done [#allocation9], 256
    $region17: #{tpu_custom_call.1} parent=1 // pred_fallthru
      _
    %p44 = scmp.eq.s32.totalorder 0, 0
    // Predicated region
    $region18: #{tpu_custom_call.1} parent=1 // pred_check
      %p45 = pneg %p44
    $region19: #{tpu_custom_call.1} parent=1 // pred_check_branch
      %47 = sbr.rel (%p45) target = $region21
    $region20: #{tpu_custom_call.1} parent=1 // pred_region
      %48 = vst [vmem:[#allocation2] sm:$0x1] 0.0
      %49 = vst [vmem:[#allocation3] sm:$0x1] 0.0
      %50 = vst [vmem:[#allocation4] sm:$0x1] 0.0
    $region21: #{tpu_custom_call.1} parent=1 // pred_fallthru
      _
    %s51 = smul.u32 0, 16
    %v52 = vlaneseq
    %v53 = vshrl.u32 %v52, 7
    %v54 = vadd.s32 %v53, 8
    %v55 = vstv %s51
    %v56 = vadd.s32 %v55, %v53
    %v57 = vadd.s32 %v55, %v54
    %vm58 = vcmp.lt.s32.totalorder %v56, 16
    %vm59 = vcmp.lt.s32.totalorder %v57, 16
    %v60 = vld [vmem:[#allocation5] sm:$0xff]
    %v61 = vld [vmem:[#allocation5 + $0x8] sm:$0xff]
    %v62 = vld [vmem:[#allocation8] sm:$0xff]
    %v63 = vld [vmem:[#allocation8 + $0x8] sm:$0xff]
    %vm64 = vcmp.gt.f32.partialorder %v60, 0.0
    %vm65 = vcmp.gt.f32.partialorder %v61, 0.0
    %vm66 = vmand %vm58, %vm64
    %vm67 = vmand %vm59, %vm65
    %v68 = vsel %vm66, 1.0, 0.0
    %v69 = vsel %vm67, 1.0, 0.0
    %v70 = vsel %vm58, %v62, 0.0
    %v71 = vsel %vm59, %v63, 0.0
    %v72 = vld [vmem:[#allocation2] sm:$0x1]
    %v73 = vmul.f32 %v70, %v68
    %v74 = vmul.f32 %v71, %v69
    %v75 = vadd.f32 %v73, %v74
    %v76 = vrot.slane %v75, 4
    %v77 = vadd.f32 %v75, %v76
    %v78 = vrot.slane %v77, 2
    %v79 = vadd.f32 %v77, %v78
    %v80 = vrot.slane %v79, 1
    %v81 = vadd.f32 %v79, %v80
    %v82 = vadd.f32 %v72, %v81
    %83 = vst [vmem:[#allocation2] sm:$0x1] %v82
    %v84 = vld [vmem:[#allocation3] sm:$0x1]
    %v85 = vadd.f32 %v68, %v69
    %v86 = vrot.slane %v85, 4
    %v87 = vadd.f32 %v85, %v86
    %v88 = vrot.slane %v87, 2
    %v89 = vadd.f32 %v87, %v88
    %v90 = vrot.slane %v89, 1
    %v91 = vadd.f32 %v89, %v90
    %v92 = vadd.f32 %v84, %v91
    %93 = vst [vmem:[#allocation3] sm:$0x1] %v92
    %v94 = vld [vmem:[#allocation4] sm:$0x1]
    %v95 = vadd.f32 %v70, %v71
    %v96 = vrot.slane %v95, 4
    %v97 = vadd.f32 %v95, %v96
    %v98 = vrot.slane %v97, 2
    %v99 = vadd.f32 %v97, %v98
    %v100 = vrot.slane %v99, 1
    %v101 = vadd.f32 %v99, %v100
    %v102 = vadd.f32 %v94, %v101
    %103 = vst [vmem:[#allocation4] sm:$0x1] %v102
    // Predicated region
    $region22: #{tpu_custom_call.1} parent=1 // pred_check
      %p104 = pneg %p44
    $region23: #{tpu_custom_call.1} parent=1 // pred_check_branch
      %106 = sbr.rel (%p104) target = $region25
    $region24: #{tpu_custom_call.1} parent=1 // pred_region
      %v107 = vld [vmem:[#allocation2] sm:$0x1]
      %vm108 = vcmask 1040384
      %v109 = vsel %vm108, %v107, 0.0
      %110 = vadd.xlane.f32.xlu0 %v109
      %v111 = vpop.xlane.xlu0 %110
      %v112 = vld [vmem:[#allocation3] sm:$0x1]
      %v113 = vsel %vm108, %v112, 0.0
      %114 = vadd.xlane.f32.xlu0 %v113
      %v115 = vpop.xlane.xlu0 %114
      %v116 = vld [vmem:[#allocation4] sm:$0x1]
      %v117 = vsel %vm108, %v116, 0.0
      %118 = vadd.xlane.f32.xlu0 %v117
      %v119 = vpop.xlane.xlu0 %118
      %v120 = vadd.f32 %v119, %v115
      %v121 = vsub.f32 %v120, %v111
      %v122 = vadd.f32 %v121, 1e-07
      %v123 = vrcp.pop %v122
      %v124 = vmul.f32 %v122, %v123
      %v125 = vsub.f32 1.0, %v124
      %v126 = vmul.f32 %v123, %v125
      %v127 = vadd.f32 %v123, %v126
      %vm128 = vweird.f32 %v122
      %vm129 = vweird.f32 %v123
      %vm130 = vmor %vm128, %vm129
      %v131 = vsel %vm130, %v123, %v127
      %v132 = vand.u32 2147483647, %v122
      %vm133 = vcmp.eq.f32.partialorder %v132, 8.507059e+37
      %v134 = vand.u32 %v122, 2147483648
      %v135 = vor.u32 1.1754944e-38, %v134
      %v136 = vsel %vm133, %v135, %v131
      %v137 = vmul.f32 %v111, %v136
      %vm138 = vcmask 0
      %139 = vst.msk [vmem:[#allocation10] sm:$0x1] %vm138, %v137
    $region25: #{tpu_custom_call.1} parent=1 // pred_fallthru
      _
    // Predicated region
    $region26: #{tpu_custom_call.1} parent=1 // pred_check
      _
    $region27: #{tpu_custom_call.1} parent=1 // pred_check_branch
      %141 = sbr.rel (0) target = $region29
    $region28: #{tpu_custom_call.1} parent=1 // pred_region
      %143 = vsyncadd [#allocation7], 0
      %s145 = sshll.u32 [#allocation10], 4
      %s146 = int_to_ptr.vmem [resolvable:$true] %s145
      %s147 = sshll.u32 %s2, 4
      %s148 = int_to_ptr.hbm [resolvable:$true] %s147
      %150 = dma.vmem_to_hbm [thread:$0]  %s146, 16, %s148, [#allocation7]
    $region29: #{tpu_custom_call.1} parent=1 // pred_fallthru
      _
    // Predicated region
    $region30: #{tpu_custom_call.1} parent=1 // pred_check
      _
    $region31: #{tpu_custom_call.1} parent=1 // pred_check_branch
      %152 = sbr.rel (0) target = $region33
    $region32: #{tpu_custom_call.1} parent=1 // pred_region
      %154 = dma.done [#allocation7], 16
    $region33: #{tpu_custom_call.1} parent=1 // pred_fallthru
      _
    %155 = vsyncpa [#allocation6], 1
    %156 = vsyncpa [#allocation9], 1
    %157 = vsyncpa [#allocation7], 1

</llo_original>
